<compile_context>
chip_gen: v7x
topology: tpu7x:2x2x1
jax: 0.10.0
libtpu: 0.0.40
codegen_flags: <defaults>
</compile_context>

<pallas_src>
import math
import functools

import jax
import jax.numpy as jnp
from jax.experimental import pallas as pl
from jax.experimental.pallas import tpu as pltpu


# ----------------------------------------------------------------------------- config

_TM, _TN, _TK = 1024, 1024, 2048      # matmul tile caps (full dim used when smaller)
_TQ = 256                             # attention q-block rows
_TLN = 1024                           # layer-norm row tile
_VMEM_LIMIT = 48 * 1024 * 1024        # explicit scoped-VMEM limit (covers v5e default)


def _round_up(x, m):
    return (x + m - 1) // m * m


def _mosaic_params(sem):
    return pltpu.CompilerParams(dimension_semantics=sem,
                                vmem_limit_bytes=_VMEM_LIMIT)


# ----------------------------------------------------------------------------- matmul

def _bias_act(y, b, act):
    y = y + b
    if act == "relu":
        y = jnp.maximum(y, 0.0)
    return y


def _mm_kernel_nk1(x_ref, w_ref, b_ref, o_ref, *, act):
    # Single K step: no accumulator scratch at all.
    x = x_ref[...]
    if x.dtype != jnp.bfloat16:
        x = x.astype(jnp.bfloat16)      # cast in VMEM, not in HBM
    y = jnp.dot(x, w_ref[...], preferred_element_type=jnp.float32)
    o_ref[...] = _bias_act(y, b_ref[...], act).astype(o_ref.dtype)


def _mm_kernel_acc(x_ref, w_ref, b_ref, o_ref, acc_ref, *, act):
    @pl.when(pl.program_id(2) == 0)
    def _():
        acc_ref[...] = jnp.zeros_like(acc_ref)

    x = x_ref[...]
    if x.dtype != jnp.bfloat16:
        x = x.astype(jnp.bfloat16)
    acc_ref[...] += jnp.dot(x, w_ref[...], preferred_element_type=jnp.float32)

    @pl.when(pl.program_id(2) == pl.num_programs(2) - 1)
    def _():
        o_ref[...] = _bias_act(acc_ref[...], b_ref[...], act).astype(o_ref.dtype)


def _mm_kernel_acc_f32out(x_ref, w_ref, b_ref, o_ref, *, act):
    # f32 output block is resident across k -> accumulate directly, no scratch.
    @pl.when(pl.program_id(2) == 0)
    def _():
        o_ref[...] = jnp.zeros_like(o_ref)

    x = x_ref[...]
    if x.dtype != jnp.bfloat16:
        x = x.astype(jnp.bfloat16)
    o_ref[...] += jnp.dot(x, w_ref[...], preferred_element_type=jnp.float32)

    @pl.when(pl.program_id(2) == pl.num_programs(2) - 1)
    def _():
        o_ref[...] = _bias_act(o_ref[...], b_ref[...], act)


def linear(x2d, w, b, act=None, out_dtype=jnp.bfloat16):
    """x2d: (M, K) @ w: (K, N) + b: (1, N) -> (M, N) in out_dtype, optional fused ReLU.

    Grid is (N/tn, M/tm, K/tk) with k innermost and M the inner non-reduction axis, so
    the weight tile stays VMEM-resident across all M tiles of an N tile (K <= tk is the
    common case).  Operands are bf16 on the MXU, accumulation f32.
    """
    M, K = x2d.shape
    Kw, N = w.shape
    assert Kw == K and b.shape == (1, N)
    if w.dtype != jnp.bfloat16:           # weights are pre-cast at init; fallback only
        w = w.astype(jnp.bfloat16)

    def pick(d, cap):
        if d <= cap:
            return d, d                   # full-dim block: always legal, no padding
        return _round_up(d, cap), cap

    Mp, tm = pick(M, _TM)
    Kp, tk = pick(K, _TK)
    Np, tn = pick(N, _TN)

    if (Mp, Kp) != (M, K):
        x2d = jnp.pad(x2d, ((0, Mp - M), (0, Kp - K)))
    if (Kp, Np) != (K, N):                # should not trigger: weights pre-sized at init
        w = jnp.pad(w, ((0, Kp - K), (0, Np - N)))
    if Np != N:
        b = jnp.pad(b, ((0, 0), (0, Np - N)))

    nk = Kp // tk
    if nk == 1:
        kernel = functools.partial(_mm_kernel_nk1, act=act)
        scratch = []
    elif out_dtype == jnp.float32:
        kernel = functools.partial(_mm_kernel_acc_f32out, act=act)
        scratch = []
    else:
        kernel = functools.partial(_mm_kernel_acc, act=act)
        scratch = [pltpu.VMEM((tm, tn), jnp.float32)]

    out = pl.pallas_call(
        kernel,
        out_shape=jax.ShapeDtypeStruct((Mp, Np), out_dtype),
        grid=(Np // tn, Mp // tm, nk),
        in_specs=[
            pl.BlockSpec((tm, tk), lambda j, i, k: (i, k)),
            pl.BlockSpec((tk, tn), lambda j, i, k: (k, j)),   # constant over i -> resident
            pl.BlockSpec((1, tn), lambda j, i, k: (0, j)),
        ],
        out_specs=pl.BlockSpec((tm, tn), lambda j, i, k: (i, j)),
        scratch_shapes=scratch,
        compiler_params=_mosaic_params(("parallel", "parallel", "arbitrary")),
    )(x2d, w, b.astype(jnp.float32))

    if (Mp, Np) != (M, N):
        out = out[:M, :N]
    return out


# ------------------------------------------------------------------- residual + layernorm

def _add_ln_kernel(x_ref, r_ref, g_ref, b_ref, o_ref, *, eps):
    x = x_ref[...].astype(jnp.float32) + r_ref[...].astype(jnp.float32)
    mu = jnp.mean(x, axis=-1, keepdims=True)
    xc = x - mu
    var = jnp.mean(xc * xc, axis=-1, keepdims=True)
    y = xc * jax.lax.rsqrt(var + eps) * g_ref[...] + b_ref[...]
    o_ref[...] = y.astype(o_ref.dtype)


def add_layer_norm(x2d, r2d, g, b, eps=1e-5, out_dtype=jnp.bfloat16):
    """LayerNorm(x + r), row-tiled; math in f32, output bf16 for the next matmul."""
    M, D = x2d.shape
    if M <= _TLN:
        Mp, tm = M, M
    else:
        Mp, tm = _round_up(M, _TLN), _TLN
    if Mp != M:
        x2d = jnp.pad(x2d, ((0, Mp - M), (0, 0)))
        r2d = jnp.pad(r2d, ((0, Mp - M), (0, 0)))

    out = pl.pallas_call(
        functools.partial(_add_ln_kernel, eps=eps),
        out_shape=jax.ShapeDtypeStruct((Mp, D), out_dtype),
        grid=(Mp // tm,),
        in_specs=[
            pl.BlockSpec((tm, D), lambda i: (i, 0)),
            pl.BlockSpec((tm, D), lambda i: (i, 0)),
            pl.BlockSpec((1, D), lambda i: (0, 0)),
            pl.BlockSpec((1, D), lambda i: (0, 0)),
        ],
        out_specs=pl.BlockSpec((tm, D), lambda i: (i, 0)),
        compiler_params=_mosaic_params(("parallel",)),
    )(x2d, r2d, g, b)
    return out[:M] if Mp != M else out


# ----------------------------------------------------------------------------- attention

def _attn_kernel(q_ref, kv_ref, bias_ref, o_ref, *, n_head, causal):
    tq, D = q_ref.shape[1], q_ref.shape[2]
    Lk = kv_ref.shape[1]
    Dh = D // n_head

    q = q_ref[0]            # (tq, D)   bf16
    kv = kv_ref[0]          # (Lk, 2D)  bf16, [K | V] along lanes
    bias = bias_ref[0]      # (1, Lk)   f32 additive key-padding bias (0 / -1e30)

    if causal:
        q0 = pl.program_id(1) * tq
        row = jax.lax.broadcasted_iota(jnp.int32, (tq, Lk), 0) + q0
        col = jax.lax.broadcasted_iota(jnp.int32, (tq, Lk), 1)
        causal_bias = jnp.where(col > row, -1e30, 0.0).astype(jnp.float32)

    outs = []
    for h in range(n_head):                       # static unroll over heads
        qh = q[:, h * Dh:(h + 1) * Dh]
        kh = kv[:, h * Dh:(h + 1) * Dh]
        vh = kv[:, D + h * Dh:D + (h + 1) * Dh]
        # 1/sqrt(Dh) is folded into Wq at init -> no scale here.
        s = jnp.einsum('qd,kd->qk', qh, kh, preferred_element_type=jnp.float32)
        s = s + bias
        if causal:
            s = s + causal_bias
        s = s - jnp.max(s, axis=-1, keepdims=True)
        p = jnp.exp(s)
        p = p * pl.reciprocal(jnp.sum(p, axis=-1, keepdims=True), approx=True)
        outs.append(jnp.einsum('qk,kd->qd', p.astype(vh.dtype), vh,
                               preferred_element_type=jnp.float32))
    # Lane-dense (tq, D) store (no (B,H,L,Dh) layout, no wrapper transpose afterwards).
    o_ref[0] = jnp.concatenate(outs, axis=-1).astype(o_ref.dtype)


def attention(q, kv, bias, n_head, causal=False):
    """q: (B, Lq, D) bf16; kv: (B, Lk, 2D) bf16; bias: (B, 1, Lk) f32 additive.

    Grid (B, q-blocks); the fused KV block is resident across q blocks.  Output is
    (B, Lq, D) bf16, lane-dense.
    """
    B, Lq, D = q.shape
    Lk = kv.shape[1]

    if Lq <= _TQ:
        tq, Lqp = Lq, Lq
    else:
        tq = _TQ
        Lqp = _round_up(Lq, tq)
        if Lqp != Lq:
            q = jnp.pad(q, ((0, 0), (0, Lqp - Lq), (0, 0)))

    # TODO(synk): flash-style Lk tiling (online softmax) + scalar-prefetch length-based
    # masks for very long sequences; at these sizes full K/V per batch fits VMEM.
    out = pl.pallas_call(
        functools.partial(_attn_kernel, n_head=n_head, causal=causal),
        out_shape=jax.ShapeDtypeStruct((B, Lqp, D), jnp.bfloat16),
        grid=(B, Lqp // tq),
        in_specs=[
            pl.BlockSpec((1, tq, D), lambda b, qi: (b, qi, 0)),
            pl.BlockSpec((1, Lk, 2 * D), lambda b, qi: (b, 0, 0)),   # resident over qi
            pl.BlockSpec((1, 1, Lk), lambda b, qi: (b, 0, 0)),
        ],
        out_specs=pl.BlockSpec((1, tq, D), lambda b, qi: (b, qi, 0)),
        compiler_params=_mosaic_params(("parallel", "arbitrary")),
    )(q, kv, bias)
    return out[:, :Lq] if Lqp != Lq else out


# ---------------------------------------------------------------------- model building blocks

def conv2d_relu_nhwc(x, wmat, b):
    """3x3 / stride 1 / pad 1 conv in NHWC: bf16 im2col + fused matmul/bias/ReLU."""
    B, H, W, C = x.shape
    Cout = wmat.shape[1]
    xp = jnp.pad(x.astype(jnp.bfloat16), ((0, 0), (1, 1), (1, 1), (0, 0)))
    # TODO(synk): stream the 9 taps as an in-kernel reduction axis instead of
    # materializing the (bf16) im2col tensor.
    cols = jnp.concatenate(
        [xp[:, ki:ki + H, kj:kj + W, :] for ki in range(3) for kj in range(3)],
        axis=-1)                                  # (B, H, W, 9*C), patch order (ki, kj, c)
    y = linear(cols.reshape(B * H * W, 9 * C), wmat, b, act="relu")
    return y.reshape(B, H, W, Cout)


def maxpool2x2_nhwc(x):
    B, H, W, C = x.shape
    return jnp.max(x.reshape(B, H // 2, 2, W // 2, 2, C), axis=(2, 4))


def vgg_extractor(p, x):
    # x: (B, T, F)  ->  (B, T//4, hidden_dim)   (NHWC, channel-last throughout)
    x = x[:, :, :, None]
    x = conv2d_relu_nhwc(x, p["c1_w"], p["c1_b"])
    x = conv2d_relu_nhwc(x, p["c2_w"], p["c2_b"])
    x = maxpool2x2_nhwc(x)
    x = conv2d_relu_nhwc(x, p["c3_w"], p["c3_b"])
    x = conv2d_relu_nhwc(x, p["c4_w"], p["c4_b"])
    x = maxpool2x2_nhwc(x)
    B, T4, F4, C = x.shape
    # match torch transpose(1,2).view(B, T', C*F'): feature ordering (c, f)
    x = x.transpose(0, 1, 3, 2).reshape(B, T4, C * F4)
    x = linear(x.reshape(B * T4, C * F4), p["proj_w"], p["proj_b"]).reshape(B, T4, -1)
    return x


def sinusoid_pe(L, D):
    pos = jnp.arange(L, dtype=jnp.float32)[:, None]
    i = jnp.arange(0, D, 2, dtype=jnp.float32)
    div = jnp.exp(-math.log(10000.0) * i / D)
    pe = jnp.zeros((L, D), jnp.float32)
    pe = pe.at[:, 0::2].set(jnp.sin(pos * div))
    pe = pe.at[:, 1::2].set(jnp.cos(pos * div))
    return pe


def mha(p, q_in, kv_in, bias, n_head, causal=False):
    """bias: (B, 1, Lk) f32 additive key-padding mask; causal part built in-kernel."""
    B, Lq, D = q_in.shape
    Lk = kv_in.shape[1]
    q = linear(q_in.reshape(B * Lq, D), p["wq"], p["bq"]).reshape(B, Lq, D)
    kv = linear(kv_in.reshape(B * Lk, D), p["wkv"], p["bkv"]).reshape(B, Lk, 2 * D)
    ctx = attention(q, kv, bias, n_head, causal=causal)          # (B, Lq, D) lane-dense
    return linear(ctx.reshape(B * Lq, D), p["wo"], p["bo"]).reshape(B, Lq, D)


def ffn(p, x):
    B, L, D = x.shape
    h = linear(x.reshape(B * L, D), p["w1"], p["b1"], act="relu")
    y = linear(h, p["w2"], p["b2"])
    return y.reshape(B, L, D)


def add_ln(p, new, res):
    B, L, D = new.shape
    return add_layer_norm(new.reshape(B * L, D), res.reshape(B * L, D),
                          p["g"], p["b"]).reshape(B, L, D)


def encoder_layer(p, x, bias, n_head):
    x = add_ln(p["ln1"], mha(p["self"], x, x, bias, n_head), x)
    x = add_ln(p["ln2"], ffn(p["ff"], x), x)
    return x


def decoder_layer(p, x, self_bias, enc_out, cross_bias, n_head):
    x = add_ln(p["ln1"], mha(p["self"], x, x, self_bias, n_head, causal=True), x)
    x = add_ln(p["ln2"], mha(p["src"], x, enc_out, cross_bias, n_head), x)
    x = add_ln(p["ln3"], ffn(p["ff"], x), x)
    return x


def length_pad_bias(lengths, T):
    """(B, 1, T) f32 additive bias: -1e30 at padded key positions."""
    blocked = jnp.arange(T)[None, :] >= lengths[:, None]
    return jnp.where(blocked, -1e30, 0.0).astype(jnp.float32)[:, None, :]


def token_pad_bias(tokens, pad_id):
    """(B, 1, L) f32 additive bias from padding tokens (computed on tgt_in AFTER
    pad->eos replacement, matching the reference target_mask)."""
    blocked = tokens == pad_id
    return jnp.where(blocked, -1e30, 0.0).astype(jnp.float32)[:, None, :]


def transformer_forward(params, inputs, input_length, tgt, cfg):
    n_head = cfg["n_head"]

    # feature extractor + length subsampling (>> 2)
    x = vgg_extractor(params["conv"], inputs)                    # (B, T4, D) bf16
    length4 = input_length >> 2
    B, T, D = x.shape
    enc_bias = length_pad_bias(length4, T)                       # (B, 1, T)

    # encoder
    x = (x.astype(jnp.float32) * math.sqrt(D) + sinusoid_pe(T, D)[None]).astype(jnp.bfloat16)
    for lp in params["enc_layers"]:
        x = encoder_layer(lp, x, enc_bias, n_head)
    enc_out = x

    # make_in_out: pad->eos for decoder input, drop last col; golds = drop sos
    tgt_in = jnp.where(tgt == cfg["pad_id"], cfg["eos_id"], tgt)[:, :-1]
    golds = tgt[:, 1:]
    L = tgt_in.shape[1]

    dec_self_bias = token_pad_bias(tgt_in, cfg["pad_id"])        # (B, 1, L)
    cross_bias = enc_bias                                        # (B, 1, T)

    # decoder (embedding gather is plain-JAX glue)
    y = jnp.take(params["dec"]["emb"], tgt_in, axis=0) * math.sqrt(D) + sinusoid_pe(L, D)[None]
    y = y.astype(jnp.bfloat16)
    for lp in params["dec_layers"]:
        y = decoder_layer(lp, y, dec_self_bias, enc_out, cross_bias, n_head)

    logits = linear(y.reshape(B * L, D), params["dec"]["out_w"], params["dec"]["out_b"],
                    out_dtype=jnp.float32)                       # (B*L, Vp), lane-dense
    preds = logits[:, :cfg["out_dim"]].reshape(B, L, cfg["out_dim"])
    return preds, golds


# ----------------------------------------------------------------------------- parameters

def init_params(key, cfg):
    D, Fd, V = cfg["hidden_dim"], cfg["filter_dim"], cfg["out_dim"]
    in_dim, H = cfg["in_dim"], cfg["n_head"]
    Dh = D // H
    qscale = 1.0 / math.sqrt(Dh)                 # folded into Wq/bq at init
    C1, C2 = 64, 128                             # standard VGG2L channels
    keys = iter(jax.random.split(key, 512))

    def xavier(shape, fan_in, fan_out):
        bound = math.sqrt(6.0 / (fan_in + fan_out))
        return jax.random.uniform(next(keys), shape, jnp.float32, -bound, bound)

    def lin_w(din, dout, scale=1.0):
        return (xavier((din, dout), din, dout) * scale).astype(jnp.bfloat16)

    def zeros_b(dout):
        return jnp.zeros((1, dout), jnp.float32)

    def attn_p():
        # K/V weights pre-concatenated; Q pre-scaled; everything bf16 at init time.
        return {"wq": lin_w(D, D, qscale), "bq": zeros_b(D),
                "wkv": jnp.concatenate([lin_w(D, D), lin_w(D, D)], axis=1),
                "bkv": zeros_b(2 * D),
                "wo": lin_w(D, D), "bo": zeros_b(D)}

    def ff_p():
        return {"w1": lin_w(D, Fd), "b1": zeros_b(Fd),
                "w2": lin_w(Fd, D), "b2": zeros_b(D)}

    def ln_p():
        return {"g": jnp.ones((1, D), jnp.float32), "b": jnp.zeros((1, D), jnp.float32)}

    def conv_p(cin, cout):
        w = xavier((cout, cin, 3, 3), cin * 9, cout * 9)          # torch layout
        wmat = w.transpose(2, 3, 1, 0).reshape(9 * cin, cout).astype(jnp.bfloat16)
        return wmat, zeros_b(cout)

    conv = {}
    conv["c1_w"], conv["c1_b"] = conv_p(1, C1)
    conv["c2_w"], conv["c2_b"] = conv_p(C1, C1)
    conv["c3_w"], conv["c3_b"] = conv_p(C1, C2)
    conv["c4_w"], conv["c4_b"] = conv_p(C2, C2)
    conv["proj_w"] = lin_w(C2 * (in_dim // 4), D)
    conv["proj_b"] = zeros_b(D)

    enc_layers = [{"self": attn_p(), "ff": ff_p(), "ln1": ln_p(), "ln2": ln_p()}
                  for _ in range(cfg["enc_n_layers"])]
    dec_layers = [{"self": attn_p(), "src": attn_p(), "ff": ff_p(),
                   "ln1": ln_p(), "ln2": ln_p(), "ln3": ln_p()}
                  for _ in range(cfg["dec_n_layers"])]

    Vp = _round_up(V, 128)                       # lane-dense logits; slice back to V after
    out_w = jnp.zeros((D, Vp), jnp.float32).at[:, :V].set(
        xavier((D, V), D, V)).astype(jnp.bfloat16)
    dec = {"emb": jax.random.normal(next(keys), (V, D), jnp.float32),
           "out_w": out_w, "out_b": jnp.zeros((1, Vp), jnp.float32)}

    return {"conv": conv, "enc_layers": enc_layers, "dec_layers": dec_layers, "dec": dec}


# ----------------------------------------------------------------------------- main

if __name__ == "__main__":
    cfg = dict(in_dim=16, hidden_dim=32, filter_dim=64, n_head=4,
               enc_n_layers=2, dec_n_layers=2, out_dim=40,
               pad_id=0, sos_id=1, eos_id=2)

    key = jax.random.PRNGKey(0)
    pkey, ikey, tkey = jax.random.split(key, 3)
    params = init_params(pkey, cfg)

    B, T, L = 2, 16, 8
    inputs = jax.random.normal(ikey, (B, T, cfg["in_dim"]), jnp.float32)
    input_length = jnp.array([16, 12], dtype=jnp.int32)
    toks = jax.random.randint(tkey, (B, L - 3), 3, cfg["out_dim"]).astype(jnp.int32)
    tgt = jnp.concatenate(
        [jnp.full((B, 1), cfg["sos_id"], jnp.int32),
         toks,
         jnp.full((B, 1), cfg["eos_id"], jnp.int32),
         jnp.full((B, 1), cfg["pad_id"], jnp.int32)],
        axis=1,
    )  # (B, 8): [sos, tokens..., eos, pad]

    preds, golds = transformer_forward(params, inputs, input_length, tgt, cfg)
    jax.block_until_ready(preds)
    jax.block_until_ready(golds)

    assert preds.shape == (B, L - 1, cfg["out_dim"]), preds.shape
    assert golds.shape == (B, L - 1), golds.shape
    assert bool(jnp.all(jnp.isfinite(preds)))
    print("KERNEL_OK")
</pallas_src>

<mosaic_0001>
module attributes {stable_mosaic.version = 11 : i64} {
  func.func @_mm_kernel_nk1(%arg0: i32, %arg1: i32, %arg2: i32, %arg3: memref<512x9xbf16, #tpu.memory_space<vmem>>, %arg4: memref<9x64xbf16, #tpu.memory_space<vmem>>, %arg5: memref<1x64xf32, #tpu.memory_space<vmem>>, %arg6: memref<512x64xbf16, #tpu.memory_space<vmem>>) attributes {dimension_semantics = [#tpu.dimension_semantics<parallel>, #tpu.dimension_semantics<parallel>, #tpu.dimension_semantics<arbitrary>], iteration_bounds = array<i64: 1, 1, 1>, scalar_prefetch = 0 : i64, scratch_operands = 0 : i64, tpu.core_type = #tpu.core_type<tc>, window_params = [{transform_indices = @transform_0, window_bounds = array<i64: 512, 9>}, {transform_indices = @transform_1, window_bounds = array<i64: 9, 64>}, {transform_indices = @transform_2, window_bounds = array<i64: 1, 64>}, {transform_indices = @transform_3, window_bounds = array<i64: 512, 64>}]} {
    %c0 = arith.constant 0 : index
    %c0_0 = arith.constant 0 : index
    %0 = vector.load %arg3[%c0, %c0_0] : memref<512x9xbf16, #tpu.memory_space<vmem>>, vector<512x9xbf16>
    %c0_1 = arith.constant 0 : index
    %c0_2 = arith.constant 0 : index
    %1 = vector.load %arg4[%c0_1, %c0_2] : memref<9x64xbf16, #tpu.memory_space<vmem>>, vector<9x64xbf16>
    %cst = arith.constant dense<0.000000e+00> : vector<512x64xf32>
    %2 = tpu.matmul %0, %1, %cst {dimension_numbers = #tpu.dot_dimension_numbers<[1], [0], [0], [1], [0, 0, 1, 1], [], []>} : vector<512x9xbf16>, vector<9x64xbf16>, vector<512x64xf32> -> vector<512x64xf32>
    %c0_3 = arith.constant 0 : index
    %c0_4 = arith.constant 0 : index
    %3 = vector.load %arg5[%c0_3, %c0_4] : memref<1x64xf32, #tpu.memory_space<vmem>>, vector<1x64xf32>
    %4 = vector.broadcast %3 : vector<1x64xf32> to vector<512x64xf32>
    %5 = arith.addf %2, %4 : vector<512x64xf32>
    %cst_5 = arith.constant 0.000000e+00 : f32
    %6 = vector.broadcast %cst_5 : f32 to vector<512x64xf32>
    %7 = arith.maximumf %5, %6 : vector<512x64xf32>
    %8 = arith.truncf %7 : vector<512x64xf32> to vector<512x64xbf16>
    %c0_6 = arith.constant 0 : index
    %c0_7 = arith.constant 0 : index
    %9 = vector.load %arg6[%c0_6, %c0_7] : memref<512x64xbf16, #tpu.memory_space<vmem>>, vector<512x64xbf16>
    tpu.vector_store %arg6[%c0_6, %c0_7], %8 {strides = array<i32>} : memref<512x64xbf16, #tpu.memory_space<vmem>>, vector<512x64xbf16>,
    return
  }
  func.func @transform_0(%arg0: i32, %arg1: i32, %arg2: i32) -> (i32, i32) {
    %c0_i32 = arith.constant 0 : i32
    return %arg1, %arg2 : i32, i32
  }
  func.func @transform_1(%arg0: i32, %arg1: i32, %arg2: i32) -> (i32, i32) {
    %c0_i32 = arith.constant 0 : i32
    return %arg2, %arg0 : i32, i32
  }
  func.func @transform_2(%arg0: i32, %arg1: i32, %arg2: i32) -> (i32, i32) {
    %c0_i32 = arith.constant 0 : i32
    %c0_i32_0 = arith.constant 0 : i32
    return %c0_i32, %arg0 : i32, i32
  }
  func.func @transform_3(%arg0: i32, %arg1: i32, %arg2: i32) -> (i32, i32) {
    %c0_i32 = arith.constant 0 : i32
    return %arg1, %arg0 : i32, i32
  }
}

</mosaic_0001>

<llo_original>
// kernel: tpu_custom_call.1
$region0: #{tpu_custom_call.1}
  #allocation0 [shape = 'u32[]', space=smem, size = 0x4, offset = 0x4, fixed_abs, tag = 'smem constant byte address 0x4 - core index']
  #allocation1 [shape = 'u32[144,128]{1,0:T(1,128)}', space=vmem, size = 0x12000, scoped, tag = 'internal scratch']
  %s0 = inlined_call_operand.vmem [shape: bf16[512,9], index: 0, kind: input, shape index: {}]
  %s1 = inlined_call_operand.vmem [shape: bf16[9,64], index: 1, kind: input, shape index: {}]
  %s2 = inlined_call_operand.vmem [shape: f32[1,64], index: 2, kind: input, shape index: {}]
  %s3 = inlined_call_operand.vmem [shape: bf16[512,64], index: 3, kind: output, shape index: {}]
  %s4 = sld [smem:[#allocation0]]
  $region22: #{tpu_custom_call.1} parent=0
    _
  %s6 = ssub.s32 1, %s4
  %s7 = scalar_select 0, %s6, %s4
  // Predicated region
  $region2: #{tpu_custom_call.1} parent=0 // pred_check
    _
  $region3: #{tpu_custom_call.1} parent=0 // pred_check_branch
    %9 = sbr.rel (0) target = $region5
  $region4: #{tpu_custom_call.1} parent=0 // pred_region
    _
  $region5: #{tpu_custom_call.1} parent=0 // pred_fallthru
    _
  // Predicated region
  $region6: #{tpu_custom_call.1} parent=0 // pred_check
    _
  $region7: #{tpu_custom_call.1} parent=0 // pred_check_branch
    %11 = sbr.rel (0) target = $region9
  $region8: #{tpu_custom_call.1} parent=0 // pred_region
    _
  $region9: #{tpu_custom_call.1} parent=0 // pred_fallthru
    _
  // Predicated region
  $region10: #{tpu_custom_call.1} parent=0 // pred_check
    _
  $region11: #{tpu_custom_call.1} parent=0 // pred_check_branch
    %13 = sbr.rel (0) target = $region13
  $region12: #{tpu_custom_call.1} parent=0 // pred_region
    _
  $region13: #{tpu_custom_call.1} parent=0 // pred_fallthru
    _
  %v15 = vld [vmem:[%s0] sm:$0xf]
  %v16 = vld [vmem:[%s0 + $0x4] sm:$0xf]
  %v17 = vld [vmem:[%s0 + $0x8] sm:$0xf]
  %v18 = vld [vmem:[%s0 + $0xc] sm:$0xf]
  %v19 = vld [vmem:[%s0 + $0x10] sm:$0xf]
  %v20 = vld [vmem:[%s0 + $0x14] sm:$0xf]
  %v21 = vld [vmem:[%s0 + $0x18] sm:$0xf]
  %v22 = vld [vmem:[%s0 + $0x1c] sm:$0xf]
  %v23 = vld [vmem:[%s0 + $0x20] sm:$0xf]
  %v24 = vld [vmem:[%s0 + $0x24] sm:$0xf]
  %v25 = vld [vmem:[%s0 + $0x28] sm:$0xf]
  %v26 = vld [vmem:[%s0 + $0x2c] sm:$0xf]
  %v27 = vld [vmem:[%s0 + $0x30] sm:$0xf]
  %v28 = vld [vmem:[%s0 + $0x34] sm:$0xf]
  %v29 = vld [vmem:[%s0 + $0x38] sm:$0xf]
  %v30 = vld [vmem:[%s0 + $0x3c] sm:$0xf]
  %v31 = vld [vmem:[%s0 + $0x40] sm:$0xf]
  %v32 = vld [vmem:[%s0 + $0x44] sm:$0xf]
  %v33 = vld [vmem:[%s0 + $0x48] sm:$0xf]
  %v34 = vld [vmem:[%s0 + $0x4c] sm:$0xf]
  %v35 = vld [vmem:[%s0 + $0x50] sm:$0xf]
  %v36 = vld [vmem:[%s0 + $0x54] sm:$0xf]
  %v37 = vld [vmem:[%s0 + $0x58] sm:$0xf]
  %v38 = vld [vmem:[%s0 + $0x5c] sm:$0xf]
  %v39 = vld [vmem:[%s0 + $0x60] sm:$0xf]
  %v40 = vld [vmem:[%s0 + $0x64] sm:$0xf]
  %v41 = vld [vmem:[%s0 + $0x68] sm:$0xf]
  %v42 = vld [vmem:[%s0 + $0x6c] sm:$0xf]
  %v43 = vld [vmem:[%s0 + $0x70] sm:$0xf]
  %v44 = vld [vmem:[%s0 + $0x74] sm:$0xf]
  %v45 = vld [vmem:[%s0 + $0x78] sm:$0xf]
  %v46 = vld [vmem:[%s0 + $0x7c] sm:$0xf]
  %v47 = vld [vmem:[%s0 + $0x80] sm:$0xf]
  %v48 = vld [vmem:[%s0 + $0x84] sm:$0xf]
  %v49 = vld [vmem:[%s0 + $0x88] sm:$0xf]
  %v50 = vld [vmem:[%s0 + $0x8c] sm:$0xf]
  %v51 = vld [vmem:[%s0 + $0x90] sm:$0xf]
  %v52 = vld [vmem:[%s0 + $0x94] sm:$0xf]
  %v53 = vld [vmem:[%s0 + $0x98] sm:$0xf]
  %v54 = vld [vmem:[%s0 + $0x9c] sm:$0xf]
  %v55 = vld [vmem:[%s0 + $0xa0] sm:$0xf]
  %v56 = vld [vmem:[%s0 + $0xa4] sm:$0xf]
  %v57 = vld [vmem:[%s0 + $0xa8] sm:$0xf]
  %v58 = vld [vmem:[%s0 + $0xac] sm:$0xf]
  %v59 = vld [vmem:[%s0 + $0xb0] sm:$0xf]
  %v60 = vld [vmem:[%s0 + $0xb4] sm:$0xf]
  %v61 = vld [vmem:[%s0 + $0xb8] sm:$0xf]
  %v62 = vld [vmem:[%s0 + $0xbc] sm:$0xf]
  %v63 = vld [vmem:[%s0 + $0xc0] sm:$0xf]
  %v64 = vld [vmem:[%s0 + $0xc4] sm:$0xf]
  %v65 = vld [vmem:[%s0 + $0xc8] sm:$0xf]
  %v66 = vld [vmem:[%s0 + $0xcc] sm:$0xf]
  %v67 = vld [vmem:[%s0 + $0xd0] sm:$0xf]
  %v68 = vld [vmem:[%s0 + $0xd4] sm:$0xf]
  %v69 = vld [vmem:[%s0 + $0xd8] sm:$0xf]
  %v70 = vld [vmem:[%s0 + $0xdc] sm:$0xf]
  %v71 = vld [vmem:[%s0 + $0xe0] sm:$0xf]
  %v72 = vld [vmem:[%s0 + $0xe4] sm:$0xf]
  %v73 = vld [vmem:[%s0 + $0xe8] sm:$0xf]
  %v74 = vld [vmem:[%s0 + $0xec] sm:$0xf]
  %v75 = vld [vmem:[%s0 + $0xf0] sm:$0xf]
  %v76 = vld [vmem:[%s0 + $0xf4] sm:$0xf]
  %v77 = vld [vmem:[%s0 + $0xf8] sm:$0xf]
  %v78 = vld [vmem:[%s0 + $0xfc] sm:$0xf]
  %v79 = vld [vmem:[%s1] sm:$0xf]
  %v80 = vld [vmem:[%s1 + $0x4] sm:$0x1]
  %v81 = vld [vmem:[%s2] sm:$0x1]
  %v83 = vlaneseq
  %v84 = vshrl.u32 %v83, 7
  %v85 = vsub.s32 0, %v84
  %v86 = vrot.slane %v81, %v85
  %v152 = vunpack.c.l.b16 %v15
  %v153 = vunpack.c.l.b16 %v16
  %v154 = vunpack.c.l.b16 %v17
  %v155 = vunpack.c.l.b16 %v18
  %v156 = vunpack.c.l.b16 %v19
  %v157 = vunpack.c.l.b16 %v20
  %v158 = vunpack.c.l.b16 %v21
  %v159 = vunpack.c.l.b16 %v22
  %v160 = vunpack.c.l.b16 %v23
  %v161 = vunpack.c.l.b16 %v24
  %v162 = vunpack.c.l.b16 %v25
  %v163 = vunpack.c.l.b16 %v26
  %v164 = vunpack.c.l.b16 %v27
  %v165 = vunpack.c.l.b16 %v28
  %v166 = vunpack.c.l.b16 %v29
  %v167 = vunpack.c.l.b16 %v30
  %v168 = vunpack.c.l.b16 %v31
  %v169 = vunpack.c.l.b16 %v32
  %v170 = vunpack.c.l.b16 %v33
  %v171 = vunpack.c.l.b16 %v34
  %v172 = vunpack.c.l.b16 %v35
  %v173 = vunpack.c.l.b16 %v36
  %v174 = vunpack.c.l.b16 %v37
  %v175 = vunpack.c.l.b16 %v38
  %v176 = vunpack.c.l.b16 %v39
  %v177 = vunpack.c.l.b16 %v40
  %v178 = vunpack.c.l.b16 %v41
  %v179 = vunpack.c.l.b16 %v42
  %v180 = vunpack.c.l.b16 %v43
  %v181 = vunpack.c.l.b16 %v44
  %v182 = vunpack.c.l.b16 %v45
  %v183 = vunpack.c.l.b16 %v46
  %v184 = vunpack.c.l.b16 %v47
  %v185 = vunpack.c.l.b16 %v48
  %v186 = vunpack.c.l.b16 %v49
  %v187 = vunpack.c.l.b16 %v50
  %v188 = vunpack.c.l.b16 %v51
  %v189 = vunpack.c.l.b16 %v52
  %v190 = vunpack.c.l.b16 %v53
  %v191 = vunpack.c.l.b16 %v54
  %v192 = vunpack.c.l.b16 %v55
  %v193 = vunpack.c.l.b16 %v56
  %v194 = vunpack.c.l.b16 %v57
  %v195 = vunpack.c.l.b16 %v58
  %v196 = vunpack.c.l.b16 %v59
  %v197 = vunpack.c.l.b16 %v60
  %v198 = vunpack.c.l.b16 %v61
  %v199 = vunpack.c.l.b16 %v62
  %v200 = vunpack.c.l.b16 %v63
  %v201 = vunpack.c.l.b16 %v64
  %v202 = vunpack.c.l.b16 %v65
  %v203 = vunpack.c.l.b16 %v66
  %v204 = vunpack.c.l.b16 %v67
  %v205 = vunpack.c.l.b16 %v68
  %v206 = vunpack.c.l.b16 %v69
  %v207 = vunpack.c.l.b16 %v70
  %v208 = vunpack.c.l.b16 %v71
  %v209 = vunpack.c.l.b16 %v72
  %v210 = vunpack.c.l.b16 %v73
  %v211 = vunpack.c.l.b16 %v74
  %v212 = vunpack.c.l.b16 %v75
  %v213 = vunpack.c.l.b16 %v76
  %v214 = vunpack.c.l.b16 %v77
  %v215 = vunpack.c.l.b16 %v78
  %v216 = vpack.c.b16 %v153, %v152
  %v217 = vpack.c.b16 %v155, %v154
  %v218 = vpack.c.b16 %v157, %v156
  %v219 = vpack.c.b16 %v159, %v158
  %v220 = vpack.c.b16 %v161, %v160
  %v221 = vpack.c.b16 %v163, %v162
  %v222 = vpack.c.b16 %v165, %v164
  %v223 = vpack.c.b16 %v167, %v166
  %v224 = vpack.c.b16 %v169, %v168
  %v225 = vpack.c.b16 %v171, %v170
  %v226 = vpack.c.b16 %v173, %v172
  %v227 = vpack.c.b16 %v175, %v174
  %v228 = vpack.c.b16 %v177, %v176
  %v229 = vpack.c.b16 %v179, %v178
  %v230 = vpack.c.b16 %v181, %v180
  %v231 = vpack.c.b16 %v183, %v182
  %v232 = vpack.c.b16 %v185, %v184
  %v233 = vpack.c.b16 %v187, %v186
  %v234 = vpack.c.b16 %v189, %v188
  %v235 = vpack.c.b16 %v191, %v190
  %v236 = vpack.c.b16 %v193, %v192
  %v237 = vpack.c.b16 %v195, %v194
  %v238 = vpack.c.b16 %v197, %v196
  %v239 = vpack.c.b16 %v199, %v198
  %v240 = vpack.c.b16 %v201, %v200
  %v241 = vpack.c.b16 %v203, %v202
  %v242 = vpack.c.b16 %v205, %v204
  %v243 = vpack.c.b16 %v207, %v206
  %v244 = vpack.c.b16 %v209, %v208
  %v245 = vpack.c.b16 %v211, %v210
  %v246 = vpack.c.b16 %v213, %v212
  %v247 = vpack.c.b16 %v215, %v214
  %v250 = vunpack.c.l.b16 %v79
  %v251 = vunpack.c.l.b16 %v80
  %v252 = vpack.c.b16 %v251, %v250
  %vm253 = vcmask 72704
  %v255 = vsel %vm253, %v216, 0
  %v258 = vsel %vm253, %v217, 0
  %v261 = vsel %vm253, %v218, 0
  %v264 = vsel %vm253, %v219, 0
  %v267 = vsel %vm253, %v220, 0
  %v270 = vsel %vm253, %v221, 0
  %v273 = vsel %vm253, %v222, 0
  %v276 = vsel %vm253, %v223, 0
  %v279 = vsel %vm253, %v224, 0
  %v282 = vsel %vm253, %v225, 0
  %v285 = vsel %vm253, %v226, 0
  %v288 = vsel %vm253, %v227, 0
  %v291 = vsel %vm253, %v228, 0
  %v294 = vsel %vm253, %v229, 0
  %v297 = vsel %vm253, %v230, 0
  %v300 = vsel %vm253, %v231, 0
  %v303 = vsel %vm253, %v232, 0
  %v306 = vsel %vm253, %v233, 0
  %v309 = vsel %vm253, %v234, 0
  %v312 = vsel %vm253, %v235, 0
  %v315 = vsel %vm253, %v236, 0
  %v318 = vsel %vm253, %v237, 0
  %v321 = vsel %vm253, %v238, 0
  %v324 = vsel %vm253, %v239, 0
  %v327 = vsel %vm253, %v240, 0
  %v330 = vsel %vm253, %v241, 0
  %v333 = vsel %vm253, %v242, 0
  %v336 = vsel %vm253, %v243, 0
  %v339 = vsel %vm253, %v244, 0
  %v342 = vsel %vm253, %v245, 0
  %v345 = vsel %vm253, %v246, 0
  %v348 = vsel %vm253, %v247, 0
  %vm350 = vcmask 1043456
  %vm351 = vcmask 1044480
  %v352 = vsel %vm350, 4294967295, 65535
  %v353 = vsel %vm351, %v352, 0
  %v355 = vand.u32 %v252, %v353
  %357 = vmatprep.subr.bf16.mxu0 0
  %358 = vmatpush1.bf16.msra.mxu0 %v355
  %359 = vmatprep.subr.bf16.mxu0 0
  %360 = vmatpush1.bf16.msra.mxu0 0
  %361 = vmatprep.subr.bf16.mxu0 0
  %362 = vmatpush1.bf16.msra.mxu0 0
  %363 = vmatprep.subr.bf16.mxu0 0
  %364 = vmatpush1.bf16.msra.mxu0 0
  %365 = vmatprep.subr.bf16.mxu0 0
  %366 = vmatpush1.bf16.msra.mxu0 0
  %367 = vmatprep.subr.bf16.mxu0 0
  %368 = vmatpush1.bf16.msra.mxu0 0
  %369 = vmatprep.subr.bf16.mxu0 0
  %370 = vmatpush1.bf16.msra.mxu0 0
  %371 = vmatprep.subr.bf16.mxu0 0
  %372 = vmatpush1.bf16.msra.mxu0 0
  %373 = vmatprep.subr.bf16.mxu0 0
  %374 = vmatpush1.bf16.msra.mxu0 0
  %375 = vmatprep.subr.bf16.mxu0 0
  %376 = vmatpush1.bf16.msra.mxu0 0
  %377 = vmatprep.subr.bf16.mxu0 0
  %378 = vmatpush1.bf16.msra.mxu0 0
  %379 = vmatprep.subr.bf16.mxu0 0
  %380 = vmatpush1.bf16.msra.mxu0 0
  %381 = vmatprep.subr.bf16.mxu0 0
  %382 = vmatpush1.bf16.msra.mxu0 0
  %383 = vmatprep.subr.bf16.mxu0 0
  %384 = vmatpush1.bf16.msra.mxu0 0
  %385 = vmatprep.subr.bf16.mxu0 0
  %386 = vmatpush1.bf16.msra.mxu0 0
  %387 = vmatprep.subr.bf16.mxu0 0
  %388 = vmatpush1.bf16.msra.mxu0 0
  %389 = vmatprep.mubr.bf16.mxu0 0
  %390 = vmatmul.mubr.bf16.gmra.mrb[0].mxu0 %v255
  %v391 = vpop.f32.mrb[0].mxu0
  %v392 = vadd.f32 %v86, %v391
  %v393 = vpop.f32.mrb[0].mxu0
  %v394 = vpop.f32.mrb[0].mxu0
  %v395 = vadd.f32 %v86, %v394
  %v396 = vpop.f32.mrb[0].mxu0
  %397 = vmatprep.mubr.bf16.mxu0 0
  %398 = vmatmul.mubr.bf16.gmra.mrb[0].mxu0 %v258
  %v399 = vpop.f32.mrb[0].mxu0
  %v400 = vadd.f32 %v86, %v399
  %v401 = vpop.f32.mrb[0].mxu0
  %v402 = vpop.f32.mrb[0].mxu0
  %v403 = vadd.f32 %v86, %v402
  %v404 = vpop.f32.mrb[0].mxu0
  %405 = vmatprep.mubr.bf16.mxu0 0
  %406 = vmatmul.mubr.bf16.gmra.mrb[0].mxu0 %v261
  %v407 = vpop.f32.mrb[0].mxu0
  %v408 = vadd.f32 %v86, %v407
  %v409 = vpop.f32.mrb[0].mxu0
  %v410 = vpop.f32.mrb[0].mxu0
  %v411 = vadd.f32 %v86, %v410
  %v412 = vpop.f32.mrb[0].mxu0
  %413 = vmatprep.mubr.bf16.mxu0 0
  %414 = vmatmul.mubr.bf16.gmra.mrb[0].mxu0 %v264
  %v415 = vpop.f32.mrb[0].mxu0
  %v416 = vadd.f32 %v86, %v415
  %v417 = vpop.f32.mrb[0].mxu0
  %v418 = vpop.f32.mrb[0].mxu0
  %v419 = vadd.f32 %v86, %v418
  %v420 = vpop.f32.mrb[0].mxu0
  %421 = vmatprep.mubr.bf16.mxu0 0
  %422 = vmatmul.mubr.bf16.gmra.mrb[0].mxu0 %v267
  %v423 = vpop.f32.mrb[0].mxu0
  %v424 = vadd.f32 %v86, %v423
  %v425 = vpop.f32.mrb[0].mxu0
  %v426 = vpop.f32.mrb[0].mxu0
  %v427 = vadd.f32 %v86, %v426
  %v428 = vpop.f32.mrb[0].mxu0
  %429 = vmatprep.mubr.bf16.mxu0 0
  %430 = vmatmul.mubr.bf16.gmra.mrb[0].mxu0 %v270
  %v431 = vpop.f32.mrb[0].mxu0
  %v432 = vadd.f32 %v86, %v431
  %v433 = vpop.f32.mrb[0].mxu0
  %v434 = vpop.f32.mrb[0].mxu0
  %v435 = vadd.f32 %v86, %v434
  %v436 = vpop.f32.mrb[0].mxu0
  %437 = vmatprep.mubr.bf16.mxu0 0
  %438 = vmatmul.mubr.bf16.gmra.mrb[0].mxu0 %v273
  %v439 = vpop.f32.mrb[0].mxu0
  %v440 = vadd.f32 %v86, %v439
  %v441 = vpop.f32.mrb[0].mxu0
  %v442 = vpop.f32.mrb[0].mxu0
  %v443 = vadd.f32 %v86, %v442
  %v444 = vpop.f32.mrb[0].mxu0
  %445 = vmatprep.mubr.bf16.mxu0 0
  %446 = vmatmul.mubr.bf16.gmra.mrb[0].mxu0 %v276
  %v447 = vpop.f32.mrb[0].mxu0
  %v448 = vadd.f32 %v86, %v447
  %v449 = vpop.f32.mrb[0].mxu0
  %v450 = vpop.f32.mrb[0].mxu0
  %v451 = vadd.f32 %v86, %v450
  %v452 = vpop.f32.mrb[0].mxu0
  %453 = vmatprep.mubr.bf16.mxu0 0
  %454 = vmatmul.mubr.bf16.gmra.mrb[0].mxu0 %v279
  %v455 = vpop.f32.mrb[0].mxu0
  %v456 = vadd.f32 %v86, %v455
  %v457 = vpop.f32.mrb[0].mxu0
  %v458 = vpop.f32.mrb[0].mxu0
  %v459 = vadd.f32 %v86, %v458
  %v460 = vpop.f32.mrb[0].mxu0
  %461 = vmatprep.mubr.bf16.mxu0 0
  %462 = vmatmul.mubr.bf16.gmra.mrb[0].mxu0 %v282
  %v463 = vpop.f32.mrb[0].mxu0
  %v464 = vadd.f32 %v86, %v463
  %v465 = vpop.f32.mrb[0].mxu0
  %v466 = vpop.f32.mrb[0].mxu0
  %v467 = vadd.f32 %v86, %v466
  %v468 = vpop.f32.mrb[0].mxu0
  %469 = vmatprep.mubr.bf16.mxu0 0
  %470 = vmatmul.mubr.bf16.gmra.mrb[0].mxu0 %v285
  %v471 = vpop.f32.mrb[0].mxu0
  %v472 = vadd.f32 %v86, %v471
  %v473 = vpop.f32.mrb[0].mxu0
  %v474 = vpop.f32.mrb[0].mxu0
  %v475 = vadd.f32 %v86, %v474
  %v476 = vpop.f32.mrb[0].mxu0
  %477 = vmatprep.mubr.bf16.mxu0 0
  %478 = vmatmul.mubr.bf16.gmra.mrb[0].mxu0 %v288
  %v479 = vpop.f32.mrb[0].mxu0
  %v480 = vadd.f32 %v86, %v479
  %v481 = vpop.f32.mrb[0].mxu0
  %v482 = vpop.f32.mrb[0].mxu0
  %v483 = vadd.f32 %v86, %v482
  %v484 = vpop.f32.mrb[0].mxu0
  %485 = vmatprep.mubr.bf16.mxu0 0
  %486 = vmatmul.mubr.bf16.gmra.mrb[0].mxu0 %v291
  %v487 = vpop.f32.mrb[0].mxu0
  %v488 = vadd.f32 %v86, %v487
  %v489 = vpop.f32.mrb[0].mxu0
  %v490 = vpop.f32.mrb[0].mxu0
  %v491 = vadd.f32 %v86, %v490
  %v492 = vpop.f32.mrb[0].mxu0
  %493 = vmatprep.mubr.bf16.mxu0 0
  %494 = vmatmul.mubr.bf16.gmra.mrb[0].mxu0 %v294
  %v495 = vpop.f32.mrb[0].mxu0
  %v496 = vadd.f32 %v86, %v495
  %v497 = vpop.f32.mrb[0].mxu0
  %v498 = vpop.f32.mrb[0].mxu0
  %v499 = vadd.f32 %v86, %v498
  %v500 = vpop.f32.mrb[0].mxu0
  %501 = vmatprep.mubr.bf16.mxu0 0
  %502 = vmatmul.mubr.bf16.gmra.mrb[0].mxu0 %v297
  %v503 = vpop.f32.mrb[0].mxu0
  %v504 = vadd.f32 %v86, %v503
  %v505 = vpop.f32.mrb[0].mxu0
  %v506 = vpop.f32.mrb[0].mxu0
  %v507 = vadd.f32 %v86, %v506
  %v508 = vpop.f32.mrb[0].mxu0
  %509 = vmatprep.mubr.bf16.mxu0 0
  %510 = vmatmul.mubr.bf16.gmra.mrb[0].mxu0 %v300
  %v511 = vpop.f32.mrb[0].mxu0
  %v512 = vadd.f32 %v86, %v511
  %v513 = vpop.f32.mrb[0].mxu0
  %v514 = vpop.f32.mrb[0].mxu0
  %v515 = vadd.f32 %v86, %v514
  %v516 = vpop.f32.mrb[0].mxu0
  %517 = vmatprep.mubr.bf16.mxu0 0
  %518 = vmatmul.mubr.bf16.gmra.mrb[0].mxu0 %v303
  %v519 = vpop.f32.mrb[0].mxu0
  %v520 = vadd.f32 %v86, %v519
  %v521 = vpop.f32.mrb[0].mxu0
  %v522 = vpop.f32.mrb[0].mxu0
  %v523 = vadd.f32 %v86, %v522
  %v524 = vpop.f32.mrb[0].mxu0
  %525 = vmatprep.mubr.bf16.mxu0 0
  %526 = vmatmul.mubr.bf16.gmra.mrb[0].mxu0 %v306
  %v527 = vpop.f32.mrb[0].mxu0
  %v528 = vadd.f32 %v86, %v527
  %v529 = vpop.f32.mrb[0].mxu0
  %v530 = vpop.f32.mrb[0].mxu0
  %v531 = vadd.f32 %v86, %v530
  %v532 = vpop.f32.mrb[0].mxu0
  %533 = vmatprep.mubr.bf16.mxu0 0
  %534 = vmatmul.mubr.bf16.gmra.mrb[0].mxu0 %v309
  %v535 = vpop.f32.mrb[0].mxu0
  %v536 = vadd.f32 %v86, %v535
  %v537 = vpop.f32.mrb[0].mxu0
  %v538 = vpop.f32.mrb[0].mxu0
  %v539 = vadd.f32 %v86, %v538
  %v540 = vpop.f32.mrb[0].mxu0
  %541 = vmatprep.mubr.bf16.mxu0 0
  %542 = vmatmul.mubr.bf16.gmra.mrb[0].mxu0 %v312
  %v543 = vpop.f32.mrb[0].mxu0
  %v544 = vadd.f32 %v86, %v543
  %v545 = vpop.f32.mrb[0].mxu0
  %v546 = vpop.f32.mrb[0].mxu0
  %v547 = vadd.f32 %v86, %v546
  %v548 = vpop.f32.mrb[0].mxu0
  %549 = vmatprep.mubr.bf16.mxu0 0
  %550 = vmatmul.mubr.bf16.gmra.mrb[0].mxu0 %v315
  %v551 = vpop.f32.mrb[0].mxu0
  %v552 = vadd.f32 %v86, %v551
  %v553 = vpop.f32.mrb[0].mxu0
  %v554 = vpop.f32.mrb[0].mxu0
  %v555 = vadd.f32 %v86, %v554
  %v556 = vpop.f32.mrb[0].mxu0
  %557 = vmatprep.mubr.bf16.mxu0 0
  %558 = vmatmul.mubr.bf16.gmra.mrb[0].mxu0 %v318
  %v559 = vpop.f32.mrb[0].mxu0
  %v560 = vadd.f32 %v86, %v559
  %v561 = vpop.f32.mrb[0].mxu0
  %v562 = vpop.f32.mrb[0].mxu0
  %v563 = vadd.f32 %v86, %v562
  %v564 = vpop.f32.mrb[0].mxu0
  %565 = vmatprep.mubr.bf16.mxu0 0
  %566 = vmatmul.mubr.bf16.gmra.mrb[0].mxu0 %v321
  %v567 = vpop.f32.mrb[0].mxu0
  %v568 = vadd.f32 %v86, %v567
  %v569 = vpop.f32.mrb[0].mxu0
  %v570 = vpop.f32.mrb[0].mxu0
  %v571 = vadd.f32 %v86, %v570
  %v572 = vpop.f32.mrb[0].mxu0
  %573 = vmatprep.mubr.bf16.mxu0 0
  %574 = vmatmul.mubr.bf16.gmra.mrb[0].mxu0 %v324
  %v575 = vpop.f32.mrb[0].mxu0
  %v576 = vadd.f32 %v86, %v575
  %v577 = vpop.f32.mrb[0].mxu0
  %v578 = vpop.f32.mrb[0].mxu0
  %v579 = vadd.f32 %v86, %v578
  %v580 = vpop.f32.mrb[0].mxu0
  %581 = vmatprep.mubr.bf16.mxu0 0
  %582 = vmatmul.mubr.bf16.gmra.mrb[0].mxu0 %v327
  %v583 = vpop.f32.mrb[0].mxu0
  %v584 = vadd.f32 %v86, %v583
  %v585 = vpop.f32.mrb[0].mxu0
  %v586 = vpop.f32.mrb[0].mxu0
  %v587 = vadd.f32 %v86, %v586
  %v588 = vpop.f32.mrb[0].mxu0
  %589 = vmatprep.mubr.bf16.mxu0 0
  %590 = vmatmul.mubr.bf16.gmra.mrb[0].mxu0 %v330
  %v591 = vpop.f32.mrb[0].mxu0
  %v592 = vadd.f32 %v86, %v591
  %v593 = vpop.f32.mrb[0].mxu0
  %v594 = vpop.f32.mrb[0].mxu0
  %v595 = vadd.f32 %v86, %v594
  %v596 = vpop.f32.mrb[0].mxu0
  %597 = vmatprep.mubr.bf16.mxu0 0
  %598 = vmatmul.mubr.bf16.gmra.mrb[0].mxu0 %v333
  %v599 = vpop.f32.mrb[0].mxu0
  %v600 = vadd.f32 %v86, %v599
  %v601 = vpop.f32.mrb[0].mxu0
  %v602 = vpop.f32.mrb[0].mxu0
  %v603 = vadd.f32 %v86, %v602
  %v604 = vpop.f32.mrb[0].mxu0
  %605 = vmatprep.mubr.bf16.mxu0 0
  %606 = vmatmul.mubr.bf16.gmra.mrb[0].mxu0 %v336
  %v607 = vpop.f32.mrb[0].mxu0
  %v608 = vadd.f32 %v86, %v607
  %v609 = vpop.f32.mrb[0].mxu0
  %v610 = vpop.f32.mrb[0].mxu0
  %v611 = vadd.f32 %v86, %v610
  %v612 = vpop.f32.mrb[0].mxu0
  %613 = vmatprep.mubr.bf16.mxu0 0
  %614 = vmatmul.mubr.bf16.gmra.mrb[0].mxu0 %v339
  %v615 = vpop.f32.mrb[0].mxu0
  %v616 = vadd.f32 %v86, %v615
  %v617 = vpop.f32.mrb[0].mxu0
  %v618 = vpop.f32.mrb[0].mxu0
  %v619 = vadd.f32 %v86, %v618
  %v620 = vpop.f32.mrb[0].mxu0
  %621 = vmatprep.mubr.bf16.mxu0 0
  %622 = vmatmul.mubr.bf16.gmra.mrb[0].mxu0 %v342
  %v623 = vpop.f32.mrb[0].mxu0
  %v624 = vadd.f32 %v86, %v623
  %v625 = vpop.f32.mrb[0].mxu0
  %v626 = vpop.f32.mrb[0].mxu0
  %v627 = vadd.f32 %v86, %v626
  %v628 = vpop.f32.mrb[0].mxu0
  %629 = vmatprep.mubr.bf16.mxu0 0
  %630 = vmatmul.mubr.bf16.gmra.mrb[0].mxu0 %v345
  %v631 = vpop.f32.mrb[0].mxu0
  %v632 = vadd.f32 %v86, %v631
  %v633 = vpop.f32.mrb[0].mxu0
  %v634 = vpop.f32.mrb[0].mxu0
  %v635 = vadd.f32 %v86, %v634
  %v636 = vpop.f32.mrb[0].mxu0
  %637 = vmatprep.mubr.bf16.mxu0 0
  %638 = vmatmul.mubr.bf16.gmra.mrb[0].mxu0 %v348
  %v639 = vpop.f32.mrb[0].mxu0
  %v640 = vadd.f32 %v86, %v639
  %v641 = vpop.f32.mrb[0].mxu0
  %v642 = vpop.f32.mrb[0].mxu0
  %v643 = vadd.f32 %v86, %v642
  %v644 = vpop.f32.mrb[0].mxu0
  %645 = vdwg.mxu0
  %v646 = vmax.f32 %v392, 0.0
  %v647 = vmax.f32 %v395, 0.0
  %v648 = vmax.f32 %v400, 0.0
  %v649 = vmax.f32 %v403, 0.0
  %v650 = vmax.f32 %v408, 0.0
  %v651 = vmax.f32 %v411, 0.0
  %v652 = vmax.f32 %v416, 0.0
  %v653 = vmax.f32 %v419, 0.0
  %v654 = vmax.f32 %v424, 0.0
  %v655 = vmax.f32 %v427, 0.0
  %v656 = vmax.f32 %v432, 0.0
  %v657 = vmax.f32 %v435, 0.0
  %v658 = vmax.f32 %v440, 0.0
  %v659 = vmax.f32 %v443, 0.0
  %v660 = vmax.f32 %v448, 0.0
  %v661 = vmax.f32 %v451, 0.0
  %v662 = vmax.f32 %v456, 0.0
  %v663 = vmax.f32 %v459, 0.0
  %v664 = vmax.f32 %v464, 0.0
  %v665 = vmax.f32 %v467, 0.0
  %v666 = vmax.f32 %v472, 0.0
  %v667 = vmax.f32 %v475, 0.0
  %v668 = vmax.f32 %v480, 0.0
  %v669 = vmax.f32 %v483, 0.0
  %v670 = vmax.f32 %v488, 0.0
  %v671 = vmax.f32 %v491, 0.0
  %v672 = vmax.f32 %v496, 0.0
  %v673 = vmax.f32 %v499, 0.0
  %v674 = vmax.f32 %v504, 0.0
  %v675 = vmax.f32 %v507, 0.0
  %v676 = vmax.f32 %v512, 0.0
  %v677 = vmax.f32 %v515, 0.0
  %v678 = vmax.f32 %v520, 0.0
  %v679 = vmax.f32 %v523, 0.0
  %v680 = vmax.f32 %v528, 0.0
  %v681 = vmax.f32 %v531, 0.0
  %v682 = vmax.f32 %v536, 0.0
  %v683 = vmax.f32 %v539, 0.0
  %v684 = vmax.f32 %v544, 0.0
  %v685 = vmax.f32 %v547, 0.0
  %v686 = vmax.f32 %v552, 0.0
  %v687 = vmax.f32 %v555, 0.0
  %v688 = vmax.f32 %v560, 0.0
  %v689 = vmax.f32 %v563, 0.0
  %v690 = vmax.f32 %v568, 0.0
  %v691 = vmax.f32 %v571, 0.0
  %v692 = vmax.f32 %v576, 0.0
  %v693 = vmax.f32 %v579, 0.0
  %v694 = vmax.f32 %v584, 0.0
  %v695 = vmax.f32 %v587, 0.0
  %v696 = vmax.f32 %v592, 0.0
  %v697 = vmax.f32 %v595, 0.0
  %v698 = vmax.f32 %v600, 0.0
  %v699 = vmax.f32 %v603, 0.0
  %v700 = vmax.f32 %v608, 0.0
  %v701 = vmax.f32 %v611, 0.0
  %v702 = vmax.f32 %v616, 0.0
  %v703 = vmax.f32 %v619, 0.0
  %v704 = vmax.f32 %v624, 0.0
  %v705 = vmax.f32 %v627, 0.0
  %v706 = vmax.f32 %v632, 0.0
  %v707 = vmax.f32 %v635, 0.0
  %v708 = vmax.f32 %v640, 0.0
  %v709 = vmax.f32 %v643, 0.0
  %v710 = vpack.c.bf16 %v647, %v646
  %v711 = vpack.c.bf16 %v649, %v648
  %v712 = vpack.c.bf16 %v651, %v650
  %v713 = vpack.c.bf16 %v653, %v652
  %v714 = vpack.c.bf16 %v655, %v654
  %v715 = vpack.c.bf16 %v657, %v656
  %v716 = vpack.c.bf16 %v659, %v658
  %v717 = vpack.c.bf16 %v661, %v660
  %v718 = vpack.c.bf16 %v663, %v662
  %v719 = vpack.c.bf16 %v665, %v664
  %v720 = vpack.c.bf16 %v667, %v666
  %v721 = vpack.c.bf16 %v669, %v668
  %v722 = vpack.c.bf16 %v671, %v670
  %v723 = vpack.c.bf16 %v673, %v672
  %v724 = vpack.c.bf16 %v675, %v674
  %v725 = vpack.c.bf16 %v677, %v676
  %v726 = vpack.c.bf16 %v679, %v678
  %v727 = vpack.c.bf16 %v681, %v680
  %v728 = vpack.c.bf16 %v683, %v682
  %v729 = vpack.c.bf16 %v685, %v684
  %v730 = vpack.c.bf16 %v687, %v686
  %v731 = vpack.c.bf16 %v689, %v688
  %v732 = vpack.c.bf16 %v691, %v690
  %v733 = vpack.c.bf16 %v693, %v692
  %v734 = vpack.c.bf16 %v695, %v694
  %v735 = vpack.c.bf16 %v697, %v696
  %v736 = vpack.c.bf16 %v699, %v698
  %v737 = vpack.c.bf16 %v701, %v700
  %v738 = vpack.c.bf16 %v703, %v702
  %v739 = vpack.c.bf16 %v705, %v704
  %v740 = vpack.c.bf16 %v707, %v706
  %v741 = vpack.c.bf16 %v709, %v708
  %v774 = vunpack.c.l.b16 %v710
  %v775 = vunpack.c.h.b16 %v710
  %v776 = vunpack.c.l.b16 %v711
  %v777 = vunpack.c.h.b16 %v711
  %v778 = vunpack.c.l.b16 %v712
  %v779 = vunpack.c.h.b16 %v712
  %v780 = vunpack.c.l.b16 %v713
  %v781 = vunpack.c.h.b16 %v713
  %v782 = vunpack.c.l.b16 %v714
  %v783 = vunpack.c.h.b16 %v714
  %v784 = vunpack.c.l.b16 %v715
  %v785 = vunpack.c.h.b16 %v715
  %v786 = vunpack.c.l.b16 %v716
  %v787 = vunpack.c.h.b16 %v716
  %v788 = vunpack.c.l.b16 %v717
  %v789 = vunpack.c.h.b16 %v717
  %v790 = vunpack.c.l.b16 %v718
  %v791 = vunpack.c.h.b16 %v718
  %v792 = vunpack.c.l.b16 %v719
  %v793 = vunpack.c.h.b16 %v719
  %v794 = vunpack.c.l.b16 %v720
  %v795 = vunpack.c.h.b16 %v720
  %v796 = vunpack.c.l.b16 %v721
  %v797 = vunpack.c.h.b16 %v721
  %v798 = vunpack.c.l.b16 %v722
  %v799 = vunpack.c.h.b16 %v722
  %v800 = vunpack.c.l.b16 %v723
  %v801 = vunpack.c.h.b16 %v723
  %v802 = vunpack.c.l.b16 %v724
  %v803 = vunpack.c.h.b16 %v724
  %v804 = vunpack.c.l.b16 %v725
  %v805 = vunpack.c.h.b16 %v725
  %v806 = vunpack.c.l.b16 %v726
  %v807 = vunpack.c.h.b16 %v726
  %v808 = vunpack.c.l.b16 %v727
  %v809 = vunpack.c.h.b16 %v727
  %v810 = vunpack.c.l.b16 %v728
  %v811 = vunpack.c.h.b16 %v728
  %v812 = vunpack.c.l.b16 %v729
  %v813 = vunpack.c.h.b16 %v729
  %v814 = vunpack.c.l.b16 %v730
  %v815 = vunpack.c.h.b16 %v730
  %v816 = vunpack.c.l.b16 %v731
  %v817 = vunpack.c.h.b16 %v731
  %v818 = vunpack.c.l.b16 %v732
  %v819 = vunpack.c.h.b16 %v732
  %v820 = vunpack.c.l.b16 %v733
  %v821 = vunpack.c.h.b16 %v733
  %v822 = vunpack.c.l.b16 %v734
  %v823 = vunpack.c.h.b16 %v734
  %v824 = vunpack.c.l.b16 %v735
  %v825 = vunpack.c.h.b16 %v735
  %v826 = vunpack.c.l.b16 %v736
  %v827 = vunpack.c.h.b16 %v736
  %v828 = vunpack.c.l.b16 %v737
  %v829 = vunpack.c.h.b16 %v737
  %v830 = vunpack.c.l.b16 %v738
  %v831 = vunpack.c.h.b16 %v738
  %v832 = vunpack.c.l.b16 %v739
  %v833 = vunpack.c.h.b16 %v739
  %v834 = vunpack.c.l.b16 %v740
  %v835 = vunpack.c.h.b16 %v740
  %v836 = vunpack.c.l.b16 %v741
  %v837 = vunpack.c.h.b16 %v741
  %v838 = vpack.c.b16 %v774, %v774
  %v839 = vpack.c.b16 %v775, %v775
  %v840 = vpack.c.b16 %v776, %v776
  %v841 = vpack.c.b16 %v777, %v777
  %v842 = vpack.c.b16 %v778, %v778
  %v843 = vpack.c.b16 %v779, %v779
  %v844 = vpack.c.b16 %v780, %v780
  %v845 = vpack.c.b16 %v781, %v781
  %v846 = vpack.c.b16 %v782, %v782
  %v847 = vpack.c.b16 %v783, %v783
  %v848 = vpack.c.b16 %v784, %v784
  %v849 = vpack.c.b16 %v785, %v785
  %v850 = vpack.c.b16 %v786, %v786
  %v851 = vpack.c.b16 %v787, %v787
  %v852 = vpack.c.b16 %v788, %v788
  %v853 = vpack.c.b16 %v789, %v789
  %v854 = vpack.c.b16 %v790, %v790
  %v855 = vpack.c.b16 %v791, %v791
  %v856 = vpack.c.b16 %v792, %v792
  %v857 = vpack.c.b16 %v793, %v793
  %v858 = vpack.c.b16 %v794, %v794
  %v859 = vpack.c.b16 %v795, %v795
  %v860 = vpack.c.b16 %v796, %v796
  %v861 = vpack.c.b16 %v797, %v797
  %v862 = vpack.c.b16 %v798, %v798
  %v863 = vpack.c.b16 %v799, %v799
  %v864 = vpack.c.b16 %v800, %v800
  %v865 = vpack.c.b16 %v801, %v801
  %v866 = vpack.c.b16 %v802, %v802
  %v867 = vpack.c.b16 %v803, %v803
  %v868 = vpack.c.b16 %v804, %v804
  %v869 = vpack.c.b16 %v805, %v805
  %v870 = vpack.c.b16 %v806, %v806
  %v871 = vpack.c.b16 %v807, %v807
  %v872 = vpack.c.b16 %v808, %v808
  %v873 = vpack.c.b16 %v809, %v809
  %v874 = vpack.c.b16 %v810, %v810
  %v875 = vpack.c.b16 %v811, %v811
  %v876 = vpack.c.b16 %v812, %v812
  %v877 = vpack.c.b16 %v813, %v813
  %v878 = vpack.c.b16 %v814, %v814
  %v879 = vpack.c.b16 %v815, %v815
  %v880 = vpack.c.b16 %v816, %v816
  %v881 = vpack.c.b16 %v817, %v817
  %v882 = vpack.c.b16 %v818, %v818
  %v883 = vpack.c.b16 %v819, %v819
  %v884 = vpack.c.b16 %v820, %v820
  %v885 = vpack.c.b16 %v821, %v821
  %v886 = vpack.c.b16 %v822, %v822
  %v887 = vpack.c.b16 %v823, %v823
  %v888 = vpack.c.b16 %v824, %v824
  %v889 = vpack.c.b16 %v825, %v825
  %v890 = vpack.c.b16 %v826, %v826
  %v891 = vpack.c.b16 %v827, %v827
  %v892 = vpack.c.b16 %v828, %v828
  %v893 = vpack.c.b16 %v829, %v829
  %v894 = vpack.c.b16 %v830, %v830
  %v895 = vpack.c.b16 %v831, %v831
  %v896 = vpack.c.b16 %v832, %v832
  %v897 = vpack.c.b16 %v833, %v833
  %v898 = vpack.c.b16 %v834, %v834
  %v899 = vpack.c.b16 %v835, %v835
  %v900 = vpack.c.b16 %v836, %v836
  %v901 = vpack.c.b16 %v837, %v837
  %vm966 = vcmask 519168
  %967 = vst.msk [vmem:[%s3] sm:$0xf] %vm966, %v838
  %968 = vst.msk [vmem:[%s3 + $0x4] sm:$0xf] %vm966, %v839
  %969 = vst.msk [vmem:[%s3 + $0x8] sm:$0xf] %vm966, %v840
  %970 = vst.msk [vmem:[%s3 + $0xc] sm:$0xf] %vm966, %v841
  %971 = vst.msk [vmem:[%s3 + $0x10] sm:$0xf] %vm966, %v842
  %972 = vst.msk [vmem:[%s3 + $0x14] sm:$0xf] %vm966, %v843
  %973 = vst.msk [vmem:[%s3 + $0x18] sm:$0xf] %vm966, %v844
  %974 = vst.msk [vmem:[%s3 + $0x1c] sm:$0xf] %vm966, %v845
  %975 = vst.msk [vmem:[%s3 + $0x20] sm:$0xf] %vm966, %v846
  %976 = vst.msk [vmem:[%s3 + $0x24] sm:$0xf] %vm966, %v847
  %977 = vst.msk [vmem:[%s3 + $0x28] sm:$0xf] %vm966, %v848
  %978 = vst.msk [vmem:[%s3 + $0x2c] sm:$0xf] %vm966, %v849
  %979 = vst.msk [vmem:[%s3 + $0x30] sm:$0xf] %vm966, %v850
  %980 = vst.msk [vmem:[%s3 + $0x34] sm:$0xf] %vm966, %v851
  %981 = vst.msk [vmem:[%s3 + $0x38] sm:$0xf] %vm966, %v852
  %982 = vst.msk [vmem:[%s3 + $0x3c] sm:$0xf] %vm966, %v853
  %983 = vst.msk [vmem:[%s3 + $0x40] sm:$0xf] %vm966, %v854
  %984 = vst.msk [vmem:[%s3 + $0x44] sm:$0xf] %vm966, %v855
  %985 = vst.msk [vmem:[%s3 + $0x48] sm:$0xf] %vm966, %v856
  %986 = vst.msk [vmem:[%s3 + $0x4c] sm:$0xf] %vm966, %v857
  %987 = vst.msk [vmem:[%s3 + $0x50] sm:$0xf] %vm966, %v858
  %988 = vst.msk [vmem:[%s3 + $0x54] sm:$0xf] %vm966, %v859
  %989 = vst.msk [vmem:[%s3 + $0x58] sm:$0xf] %vm966, %v860
  %990 = vst.msk [vmem:[%s3 + $0x5c] sm:$0xf] %vm966, %v861
  %991 = vst.msk [vmem:[%s3 + $0x60] sm:$0xf] %vm966, %v862
  %992 = vst.msk [vmem:[%s3 + $0x64] sm:$0xf] %vm966, %v863
  %993 = vst.msk [vmem:[%s3 + $0x68] sm:$0xf] %vm966, %v864
  %994 = vst.msk [vmem:[%s3 + $0x6c] sm:$0xf] %vm966, %v865
  %995 = vst.msk [vmem:[%s3 + $0x70] sm:$0xf] %vm966, %v866
  %996 = vst.msk [vmem:[%s3 + $0x74] sm:$0xf] %vm966, %v867
  %997 = vst.msk [vmem:[%s3 + $0x78] sm:$0xf] %vm966, %v868
  %998 = vst.msk [vmem:[%s3 + $0x7c] sm:$0xf] %vm966, %v869
  %999 = vst.msk [vmem:[%s3 + $0x80] sm:$0xf] %vm966, %v870
  %1000 = vst.msk [vmem:[%s3 + $0x84] sm:$0xf] %vm966, %v871
  %1001 = vst.msk [vmem:[%s3 + $0x88] sm:$0xf] %vm966, %v872
  %1002 = vst.msk [vmem:[%s3 + $0x8c] sm:$0xf] %vm966, %v873
  %1003 = vst.msk [vmem:[%s3 + $0x90] sm:$0xf] %vm966, %v874
  %1004 = vst.msk [vmem:[%s3 + $0x94] sm:$0xf] %vm966, %v875
  %1005 = vst.msk [vmem:[%s3 + $0x98] sm:$0xf] %vm966, %v876
  %1006 = vst.msk [vmem:[%s3 + $0x9c] sm:$0xf] %vm966, %v877
  %1007 = vst.msk [vmem:[%s3 + $0xa0] sm:$0xf] %vm966, %v878
  %1008 = vst.msk [vmem:[%s3 + $0xa4] sm:$0xf] %vm966, %v879
  %1009 = vst.msk [vmem:[%s3 + $0xa8] sm:$0xf] %vm966, %v880
  %1010 = vst.msk [vmem:[%s3 + $0xac] sm:$0xf] %vm966, %v881
  %1011 = vst.msk [vmem:[%s3 + $0xb0] sm:$0xf] %vm966, %v882
  %1012 = vst.msk [vmem:[%s3 + $0xb4] sm:$0xf] %vm966, %v883
  %1013 = vst.msk [vmem:[%s3 + $0xb8] sm:$0xf] %vm966, %v884
  %1014 = vst.msk [vmem:[%s3 + $0xbc] sm:$0xf] %vm966, %v885
  %1015 = vst.msk [vmem:[%s3 + $0xc0] sm:$0xf] %vm966, %v886
  %1016 = vst.msk [vmem:[%s3 + $0xc4] sm:$0xf] %vm966, %v887
  %1017 = vst.msk [vmem:[%s3 + $0xc8] sm:$0xf] %vm966, %v888
  %1018 = vst.msk [vmem:[%s3 + $0xcc] sm:$0xf] %vm966, %v889
  %1019 = vst.msk [vmem:[%s3 + $0xd0] sm:$0xf] %vm966, %v890
  %1020 = vst.msk [vmem:[%s3 + $0xd4] sm:$0xf] %vm966, %v891
  %1021 = vst.msk [vmem:[%s3 + $0xd8] sm:$0xf] %vm966, %v892
  %1022 = vst.msk [vmem:[%s3 + $0xdc] sm:$0xf] %vm966, %v893
  %1023 = vst.msk [vmem:[%s3 + $0xe0] sm:$0xf] %vm966, %v894
  %1024 = vst.msk [vmem:[%s3 + $0xe4] sm:$0xf] %vm966, %v895
  %1025 = vst.msk [vmem:[%s3 + $0xe8] sm:$0xf] %vm966, %v896
  %1026 = vst.msk [vmem:[%s3 + $0xec] sm:$0xf] %vm966, %v897
  %1027 = vst.msk [vmem:[%s3 + $0xf0] sm:$0xf] %vm966, %v898
  %1028 = vst.msk [vmem:[%s3 + $0xf4] sm:$0xf] %vm966, %v899
  %1029 = vst.msk [vmem:[%s3 + $0xf8] sm:$0xf] %vm966, %v900
  %1030 = vst.msk [vmem:[%s3 + $0xfc] sm:$0xf] %vm966, %v901
  // Predicated region
  $region14: #{tpu_custom_call.1} parent=0 // pred_check
    _
  $region15: #{tpu_custom_call.1} parent=0 // pred_check_branch
    %1032 = sbr.rel (0) target = $region17
  $region16: #{tpu_custom_call.1} parent=0 // pred_region
    _
  $region17: #{tpu_custom_call.1} parent=0 // pred_fallthru
    _
  // Predicated region
  $region18: #{tpu_custom_call.1} parent=0 // pred_check
    _
  $region19: #{tpu_custom_call.1} parent=0 // pred_check_branch
    %1034 = sbr.rel (0) target = $region21
  $region20: #{tpu_custom_call.1} parent=0 // pred_region
    _
  $region21: #{tpu_custom_call.1} parent=0 // pred_fallthru
    _

</llo_original>
